<compile_context>
chip_gen: v6e
topology: v6e:2x2x1
jax: 0.10.0
libtpu: 0.0.40
codegen_flags: <defaults>
</compile_context>

<pallas_src>
import jax
import jax.numpy as jnp
from jax.experimental import pallas as pl
from jax.experimental.pallas import tpu as pltpu


# ---------------------------------------------------------------------------
# Zero-copy alternative (preferred when consumers are Pallas kernels).
# ---------------------------------------------------------------------------
def h2dict_offsets(hdict):
    """Return {node_type: (row_offset, n_rows)} into the concatenated `h`.

    Downstream Pallas kernels can bake these trace-time constants into their
    BlockSpec index_maps (or pass them via scalar prefetch) and read their
    rows directly from `h` in HBM, avoiding the materialised split below.
    """
    out, pre = {}, 0
    for k, v in hdict.items():
        n = int(v.shape[0])
        out[k] = (pre, n)
        pre += n
    return out


# ---------------------------------------------------------------------------
# Chunk planning (trace-time, pure Python ints).
# ---------------------------------------------------------------------------
def _plan_chunks(offsets, sizes, row_bytes, *, target_chunk_bytes=512 * 1024,
                 max_chunks_per_slice=8, sublane=8):
    """Split each row-slice into (src_off, dst_off, n_rows) DMA chunks.

    Each chunk is >= ~target_chunk_bytes (so multiple DMAs are in flight per
    large slice) and, except possibly the first chunk of a ragged slice,
    starts on a sublane-tile-aligned source row (full-tile descriptors).
    """
    plan = []
    for off, size in zip(offsets, sizes):
        chunks = []
        if size > 0:
            rows_per_chunk = max(
                -(-target_chunk_bytes // row_bytes),      # >= ~512 KiB per DMA
                -(-size // max_chunks_per_slice),         # <= max chunks/slice
            )
            rows_per_chunk = -(-rows_per_chunk // sublane) * sublane
            # First chunk absorbs the misalignment of `off` so every later
            # chunk starts on a sublane-aligned source row.
            first = min(size, rows_per_chunk + ((-off) % sublane))
            chunks.append((off, 0, first))
            done = first
            while done < size:
                n = min(rows_per_chunk, size - done)
                chunks.append((off + done, done, n))
                done += n
        plan.append(chunks)
    return plan


def _make_split_kernel(chunk_plan):
    """Kernel that DMAs every planned chunk HBM->HBM, all in flight at once."""
    num_out = len(chunk_plan)

    def kernel(h_ref, *refs):
        out_refs = refs[:num_out]
        sem = refs[num_out]          # one DMA semaphore slot per chunk
        copies = []
        s = 0
        # Start every copy back-to-back (descriptor issue only uses the misc
        # slot); the DMA engines run them concurrently with no VMEM bounce.
        for oi, chunks in enumerate(chunk_plan):
            for (src_off, dst_off, n) in chunks:
                cp = pltpu.make_async_copy(
                    h_ref.at[pl.ds(src_off, n), :],
                    out_refs[oi].at[pl.ds(dst_off, n), :],
                    sem.at[s],
                )
                cp.start()
                copies.append(cp)
                s += 1
        for cp in copies:
            cp.wait()

    return kernel


# ---------------------------------------------------------------------------
# h2dict: materialised split (PyTorch semantics).
# ---------------------------------------------------------------------------
def h2dict_pallas(h, hdict, *, min_pallas_bytes=1 << 20):
    """Pallas equivalent of BaseModel.h2dict.

    h      : (N_total, D) array, concatenation of all node-type features.
    hdict  : dict[str, array]; entries' leading dims give the split sizes.
    returns: dict[str, array] with out[k] == h[pre : pre + hdict[k].shape[0]].

    For small totals (< min_pallas_bytes moved) this falls back to plain XLA
    slices, which are cheaper than a pallas_call launch and fuse into
    consumers.
    """
    N, D = h.shape
    itemsize = jnp.dtype(h.dtype).itemsize
    row_bytes = D * itemsize
    sublane = max(8, 32 // itemsize)   # 8 rows f32, 16 bf16, 32 int8

    keys = list(hdict.keys())
    sizes = [int(hdict[k].shape[0]) for k in keys]
    offsets, pre = [], 0
    for n in sizes:
        offsets.append(pre)
        pre += n
    assert pre <= N, "hdict row counts exceed the rows of h"

    moved_bytes = sum(sizes) * row_bytes

    # Small-split regime: pallas_call fixed overhead dominates — plain slices.
    if moved_bytes < min_pallas_bytes:
        return {k: h[o:o + n] for k, o, n in zip(keys, offsets, sizes)}

    # Work items with nonzero row counts go through one fused DMA kernel.
    work = [(k, o, n) for k, o, n in zip(keys, offsets, sizes) if n > 0]
    out_dict = {}

    if work:
        w_keys = [w[0] for w in work]
        w_offs = [w[1] for w in work]
        w_sizes = [w[2] for w in work]

        chunk_plan = _plan_chunks(w_offs, w_sizes, row_bytes, sublane=sublane)
        total_chunks = sum(len(c) for c in chunk_plan)
        kernel = _make_split_kernel(chunk_plan)

        out_shapes = tuple(
            jax.ShapeDtypeStruct((n, D), h.dtype) for n in w_sizes
        )
        outs = pl.pallas_call(
            kernel,
            out_shape=out_shapes,
            # h and all outputs stay in HBM (device-default placement); the
            # kernel moves data purely with DMA engines — no VMEM bounce.
            in_specs=[pl.BlockSpec(memory_space=pl.ANY)],
            out_specs=tuple(pl.BlockSpec(memory_space=pl.ANY) for _ in w_sizes),
            scratch_shapes=[pltpu.SemaphoreType.DMA((total_chunks,))],
            # Memory-bound hint: read + write of every moved byte.
            cost_estimate=pl.CostEstimate(
                flops=0, transcendentals=0, bytes_accessed=2 * moved_bytes),
        )(h)
        if not isinstance(outs, (tuple, list)):
            outs = (outs,)
        for k, o in zip(w_keys, outs):
            out_dict[k] = o

    for k, o, n in zip(keys, offsets, sizes):
        if n == 0:
            out_dict[k] = h[o:o]

    # Preserve the original hdict key order.
    return {k: out_dict[k] for k in keys}


def h2dict_ref(h, hdict):
    """Plain-JAX reference matching the PyTorch h2dict semantics."""
    pre, out = 0, {}
    for k, v in hdict.items():
        out[k] = h[pre: pre + v.shape[0]]
        pre += v.shape[0]
    return out


def _check(out, ref):
    for k in ref:
        assert out[k].shape == ref[k].shape, (k, out[k].shape, ref[k].shape)
        assert jnp.array_equal(out[k], ref[k]), f"mismatch for node type {k}"


if __name__ == "__main__":
    key = jax.random.PRNGKey(0)

    # ---- Case 1: small, ragged node counts (typical tiny hetero graph). ----
    D1 = 128
    sizes1 = {"author": 19, "paper": 37, "venue": 8}
    k_h1, *k_t1 = jax.random.split(key, 1 + len(sizes1))
    hdict1 = {
        name: jax.random.normal(kt, (n, 32), dtype=jnp.float32)
        for (name, n), kt in zip(sizes1.items(), k_t1)
    }
    h1 = jax.random.normal(k_h1, (sum(sizes1.values()), D1), dtype=jnp.float32)
    ref1 = h2dict_ref(h1, hdict1)

    # (a) default threshold -> XLA-slice fallback (small-split regime).
    out1a = {k: jax.block_until_ready(v)
             for k, v in h2dict_pallas(h1, hdict1).items()}
    _check(out1a, ref1)
    # (b) force the fused DMA kernel to exercise the Pallas path.
    out1b = {k: jax.block_until_ready(v)
             for k, v in h2dict_pallas(h1, hdict1, min_pallas_bytes=0).items()}
    _check(out1b, ref1)

    # ---- Case 2: larger slices -> chunked concurrent DMAs via Pallas. ----
    D2 = 256
    sizes2 = {"paper": 4096, "author": 1031, "venue": 73}
    k_h2, *k_t2 = jax.random.split(jax.random.PRNGKey(1), 1 + len(sizes2))
    hdict2 = {
        name: jax.random.normal(kt, (n, 16), dtype=jnp.float32)
        for (name, n), kt in zip(sizes2.items(), k_t2)
    }
    h2 = jax.random.normal(k_h2, (sum(sizes2.values()), D2), dtype=jnp.float32)
    ref2 = h2dict_ref(h2, hdict2)
    out2 = {k: jax.block_until_ready(v)
            for k, v in h2dict_pallas(h2, hdict2).items()}   # > 1 MiB -> Pallas
    _check(out2, ref2)

    # Zero-copy helper sanity check.
    offs = h2dict_offsets(hdict2)
    for k, (o, n) in offs.items():
        assert jnp.array_equal(h2[o:o + n], ref2[k])

    print("KERNEL_OK")
</pallas_src>

<mosaic_0001>
module attributes {stable_mosaic.version = 11 : i64} {
  func.func @kernel(%arg0: memref<64x128xf32, #tpu.memory_space<any>>, %arg1: memref<19x128xf32, #tpu.memory_space<any>>, %arg2: memref<37x128xf32, #tpu.memory_space<any>>, %arg3: memref<8x128xf32, #tpu.memory_space<any>>, %arg4: memref<3x!tpu.dma_semaphore, #tpu.memory_space<semaphore_mem>>) attributes {dimension_semantics = [], scalar_prefetch = 0 : i64, scratch_operands = 1 : i64, tpu.core_type = #tpu.core_type<tc>} {
    %c0_i32 = arith.constant 0 : i32
    %c0_i32_0 = arith.constant 0 : i32
    %c0_i32_1 = arith.constant 0 : i32
    %0 = tpu.memref_slice %arg0[%c0_i32_0, %c0_i32_1] : memref<64x128xf32, #tpu.memory_space<any>> -> memref<19x128xf32, #tpu.memory_space<any>>
    %c0_i32_2 = arith.constant 0 : i32
    %c0_i32_3 = arith.constant 0 : i32
    %1 = tpu.memref_slice %arg1[%c0_i32_2, %c0_i32_3] : memref<19x128xf32, #tpu.memory_space<any>> -> memref<19x128xf32, #tpu.memory_space<any>>
    %2 = tpu.memref_slice %arg4[%c0_i32] : memref<3x!tpu.dma_semaphore, #tpu.memory_space<semaphore_mem>> -> memref<1x!tpu.dma_semaphore, #tpu.memory_space<semaphore_mem>>
    %3 = tpu.memref_squeeze %2 : memref<1x!tpu.dma_semaphore, #tpu.memory_space<semaphore_mem>> -> memref<!tpu.dma_semaphore, #tpu.memory_space<semaphore_mem>>
    tpu.enqueue_dma source(%0 : memref<19x128xf32, #tpu.memory_space<any>>) target(%1 : memref<19x128xf32, #tpu.memory_space<any>>) target_semaphore(%3 : memref<!tpu.dma_semaphore, #tpu.memory_space<semaphore_mem>>)
    %c1_i32 = arith.constant 1 : i32
    %c19_i32 = arith.constant 19 : i32
    %c0_i32_4 = arith.constant 0 : i32
    %4 = tpu.memref_slice %arg0[%c19_i32, %c0_i32_4] : memref<64x128xf32, #tpu.memory_space<any>> -> memref<37x128xf32, #tpu.memory_space<any>>
    %c0_i32_5 = arith.constant 0 : i32
    %c0_i32_6 = arith.constant 0 : i32
    %5 = tpu.memref_slice %arg2[%c0_i32_5, %c0_i32_6] : memref<37x128xf32, #tpu.memory_space<any>> -> memref<37x128xf32, #tpu.memory_space<any>>
    %6 = tpu.memref_slice %arg4[%c1_i32] : memref<3x!tpu.dma_semaphore, #tpu.memory_space<semaphore_mem>> -> memref<1x!tpu.dma_semaphore, #tpu.memory_space<semaphore_mem>>
    %7 = tpu.memref_squeeze %6 : memref<1x!tpu.dma_semaphore, #tpu.memory_space<semaphore_mem>> -> memref<!tpu.dma_semaphore, #tpu.memory_space<semaphore_mem>>
    tpu.enqueue_dma source(%4 : memref<37x128xf32, #tpu.memory_space<any>>) target(%5 : memref<37x128xf32, #tpu.memory_space<any>>) target_semaphore(%7 : memref<!tpu.dma_semaphore, #tpu.memory_space<semaphore_mem>>)
    %c2_i32 = arith.constant 2 : i32
    %c56_i32 = arith.constant 56 : i32
    %c0_i32_7 = arith.constant 0 : i32
    %8 = tpu.memref_slice %arg0[%c56_i32, %c0_i32_7] : memref<64x128xf32, #tpu.memory_space<any>> -> memref<8x128xf32, #tpu.memory_space<any>>
    %c0_i32_8 = arith.constant 0 : i32
    %c0_i32_9 = arith.constant 0 : i32
    %9 = tpu.memref_slice %arg3[%c0_i32_8, %c0_i32_9] : memref<8x128xf32, #tpu.memory_space<any>> -> memref<8x128xf32, #tpu.memory_space<any>>
    %10 = tpu.memref_slice %arg4[%c2_i32] : memref<3x!tpu.dma_semaphore, #tpu.memory_space<semaphore_mem>> -> memref<1x!tpu.dma_semaphore, #tpu.memory_space<semaphore_mem>>
    %11 = tpu.memref_squeeze %10 : memref<1x!tpu.dma_semaphore, #tpu.memory_space<semaphore_mem>> -> memref<!tpu.dma_semaphore, #tpu.memory_space<semaphore_mem>>
    tpu.enqueue_dma source(%8 : memref<8x128xf32, #tpu.memory_space<any>>) target(%9 : memref<8x128xf32, #tpu.memory_space<any>>) target_semaphore(%11 : memref<!tpu.dma_semaphore, #tpu.memory_space<semaphore_mem>>)
    %c0_i32_10 = arith.constant 0 : i32
    %c0_i32_11 = arith.constant 0 : i32
    %c0_i32_12 = arith.constant 0 : i32
    %12 = tpu.memref_slice %arg0[%c0_i32_11, %c0_i32_12] : memref<64x128xf32, #tpu.memory_space<any>> -> memref<19x128xf32, #tpu.memory_space<any>>
    %c0_i32_13 = arith.constant 0 : i32
    %c0_i32_14 = arith.constant 0 : i32
    %13 = tpu.memref_slice %arg1[%c0_i32_13, %c0_i32_14] : memref<19x128xf32, #tpu.memory_space<any>> -> memref<19x128xf32, #tpu.memory_space<any>>
    %14 = tpu.memref_slice %arg4[%c0_i32_10] : memref<3x!tpu.dma_semaphore, #tpu.memory_space<semaphore_mem>> -> memref<1x!tpu.dma_semaphore, #tpu.memory_space<semaphore_mem>>
    %15 = tpu.memref_squeeze %14 : memref<1x!tpu.dma_semaphore, #tpu.memory_space<semaphore_mem>> -> memref<!tpu.dma_semaphore, #tpu.memory_space<semaphore_mem>>
    tpu.wait_dma2 semaphore(%15 : memref<!tpu.dma_semaphore, #tpu.memory_space<semaphore_mem>>) src(%12 : memref<19x128xf32, #tpu.memory_space<any>>) dst(%13 : memref<19x128xf32, #tpu.memory_space<any>>)
    %c1_i32_15 = arith.constant 1 : i32
    %c19_i32_16 = arith.constant 19 : i32
    %c0_i32_17 = arith.constant 0 : i32
    %16 = tpu.memref_slice %arg0[%c19_i32_16, %c0_i32_17] : memref<64x128xf32, #tpu.memory_space<any>> -> memref<37x128xf32, #tpu.memory_space<any>>
    %c0_i32_18 = arith.constant 0 : i32
    %c0_i32_19 = arith.constant 0 : i32
    %17 = tpu.memref_slice %arg2[%c0_i32_18, %c0_i32_19] : memref<37x128xf32, #tpu.memory_space<any>> -> memref<37x128xf32, #tpu.memory_space<any>>
    %18 = tpu.memref_slice %arg4[%c1_i32_15] : memref<3x!tpu.dma_semaphore, #tpu.memory_space<semaphore_mem>> -> memref<1x!tpu.dma_semaphore, #tpu.memory_space<semaphore_mem>>
    %19 = tpu.memref_squeeze %18 : memref<1x!tpu.dma_semaphore, #tpu.memory_space<semaphore_mem>> -> memref<!tpu.dma_semaphore, #tpu.memory_space<semaphore_mem>>
    tpu.wait_dma2 semaphore(%19 : memref<!tpu.dma_semaphore, #tpu.memory_space<semaphore_mem>>) src(%16 : memref<37x128xf32, #tpu.memory_space<any>>) dst(%17 : memref<37x128xf32, #tpu.memory_space<any>>)
    %c2_i32_20 = arith.constant 2 : i32
    %c56_i32_21 = arith.constant 56 : i32
    %c0_i32_22 = arith.constant 0 : i32
    %20 = tpu.memref_slice %arg0[%c56_i32_21, %c0_i32_22] : memref<64x128xf32, #tpu.memory_space<any>> -> memref<8x128xf32, #tpu.memory_space<any>>
    %c0_i32_23 = arith.constant 0 : i32
    %c0_i32_24 = arith.constant 0 : i32
    %21 = tpu.memref_slice %arg3[%c0_i32_23, %c0_i32_24] : memref<8x128xf32, #tpu.memory_space<any>> -> memref<8x128xf32, #tpu.memory_space<any>>
    %22 = tpu.memref_slice %arg4[%c2_i32_20] : memref<3x!tpu.dma_semaphore, #tpu.memory_space<semaphore_mem>> -> memref<1x!tpu.dma_semaphore, #tpu.memory_space<semaphore_mem>>
    %23 = tpu.memref_squeeze %22 : memref<1x!tpu.dma_semaphore, #tpu.memory_space<semaphore_mem>> -> memref<!tpu.dma_semaphore, #tpu.memory_space<semaphore_mem>>
    tpu.wait_dma2 semaphore(%23 : memref<!tpu.dma_semaphore, #tpu.memory_space<semaphore_mem>>) src(%20 : memref<8x128xf32, #tpu.memory_space<any>>) dst(%21 : memref<8x128xf32, #tpu.memory_space<any>>)
    return
  }
}

</mosaic_0001>

<llo_original>
// kernel: tpu_custom_call.1
$region0: #{tpu_custom_call.1}
  #allocation0 [shape = 'u32[]', space=smem, size = 0x4, offset = 0x4, fixed_abs, tag = 'smem constant byte address 0x4 - core index']
  #allocation1 [shape = 'u32[144,128]{1,0:T(1,128)}', space=vmem, size = 0x12000, scoped, tag = 'internal scratch']
  #allocation2 [shape = 's32[3]{0}', space=sflag, size = 0xc, scoped, tag = 'scratch operand']
  #allocation3 [shape = 's32[]', space=sflag, size = 0x4, offset = 0, fixed_abs, tag = 'sflag constant byte address 0x0 - dummy sync flag']
  #allocation4 [shape = 'u32[0]{0}', space=smem, size = 0, offset = 0, fixed_abs, tag = 'smem constant byte address 0x0 - null']
  #allocation5 [shape = 's32[]', space=sflag, size = 0x4, offset = 0, fixed_abs, tag = 'sflag constant byte address 0x0 - dummy sync flag']
  #allocation6 [shape = 'u32[0]{0}', space=smem, size = 0, offset = 0, fixed_abs, tag = 'smem constant byte address 0x0 - null']
  #allocation7 [shape = 's32[]', space=sflag, size = 0x4, offset = 0, fixed_abs, tag = 'sflag constant byte address 0x0 - dummy sync flag']
  #allocation8 [shape = 'u32[0]{0}', space=smem, size = 0, offset = 0, fixed_abs, tag = 'smem constant byte address 0x0 - null']
  %s0 = inlined_call_operand.hbm [shape: f32[64,128], index: 0, kind: input, shape index: {}]
  %s1 = inlined_call_operand.hbm [shape: f32[19,128], index: 1, kind: output, shape index: {0}]
  %s2 = inlined_call_operand.hbm [shape: f32[37,128], index: 2, kind: output, shape index: {1}]
  %s3 = inlined_call_operand.hbm [shape: f32[8,128], index: 3, kind: output, shape index: {2}]
  %4 = xla_tuple %s1, %s2, %s3
  %s5 = sld [smem:[#allocation0]]
  $region2: #{tpu_custom_call.1} parent=0
    _
  %s7 = ssub.s32 1, %s5
  %s8 = scalar_select 0, %s7, %s5
  %s10 = sshll.u32 1, 14
  %s11 = sxor.u32 4294967295, %s10
  %15 = dma.general %s0, 304, %s1, [#allocation2], 131072, [#allocation4], 0, 0
  %s16 = scalar_lea.hbm %s0, 304
  %s17 = scalar_lea.sflag [#allocation2], 1
  %s19 = sshll.u32 1, 14
  %s20 = sxor.u32 4294967295, %s19
  %24 = dma.general %s16, 592, %s2, %s17, 131072, [#allocation6], 0, 0
  %s25 = scalar_lea.hbm %s0, 896
  %s26 = scalar_lea.sflag [#allocation2], 2
  %s28 = sshll.u32 1, 14
  %s29 = sxor.u32 4294967295, %s28
  %33 = dma.general %s25, 128, %s3, %s26, 131072, [#allocation8], 0, 0
  %s34 = smul.u32 19, 1
  %s35 = sshll.u32 %s34, 4
  %36 = dma.done [#allocation2], %s35
  %s37 = smul.u32 37, 1
  %s38 = sshll.u32 %s37, 4
  %39 = dma.done %s17, %s38
  %s40 = smul.u32 8, 1
  %s41 = sshll.u32 %s40, 4
  %42 = dma.done %s26, %s41
  %43 = vsyncmov [#allocation2]
  %s44 = vpop.sfrf %43
  %p45 = scmp.eq.s32.totalorder %s44, 0
  %p46 = pneg %p45
  %48 = shalt.err (%p46)
  %s49 = scalar_lea.sflag [#allocation2], 1
  %50 = vsyncmov %s49
  %s51 = vpop.sfrf %50
  %p52 = scmp.eq.s32.totalorder %s51, 0
  %p53 = pneg %p52
  %55 = shalt.err (%p53)
  %s56 = scalar_lea.sflag [#allocation2], 2
  %57 = vsyncmov %s56
  %s58 = vpop.sfrf %57
  %p59 = scmp.eq.s32.totalorder %s58, 0
  %p60 = pneg %p59
  %62 = shalt.err (%p60)

</llo_original>
